<compile_context>
chip_gen: v7x
topology: tpu7x:2x2x1
jax: 0.10.0
libtpu: 0.0.40
codegen_flags: <defaults>
</compile_context>

<pallas_src>
import functools

import jax
import jax.numpy as jnp
from jax.experimental import pallas as pl
from jax.experimental.pallas import tpu as pltpu


def _ensemble_lse_kernel(x_ref, w_ref, ye_ref, pred_ref, *, num_members, num_classes):
    # x_ref: (tb, D+1)  w_ref: (D+1, E*C)  ->  single MXU matmul, f32 accumulation.
    y = jnp.dot(x_ref[...], w_ref[...], preferred_element_type=jnp.float32)  # (tb, E*C)

    # Lane-dense store of every member's raw predictions for this batch tile
    # (EnsembleOutput.model_predictions, flattened over the last two dims).
    ye_ref[...] = y.astype(ye_ref.dtype)

    # logsumexp over the ensemble axis: members are contiguous C-wide column
    # groups of y.  E is small and static, so unroll the max/exp chain in
    # registers (no VMEM accumulators, no per-member grid steps).
    C = num_classes
    m = y[:, 0:C]
    for e in range(1, num_members):
        m = jnp.maximum(m, y[:, e * C:(e + 1) * C])
    s = jnp.exp(y[:, 0:C] - m)
    for e in range(1, num_members):
        s = s + jnp.exp(y[:, e * C:(e + 1) * C] - m)

    # EnsembleOutput.ensemble_predictions = logsumexp(y_e, dim=0).
    pred_ref[...] = (m + jnp.log(s)).astype(pred_ref.dtype)


@functools.partial(jax.jit, static_argnames=("block_b",))
def sklearn_logsumexp_ensemble(x, w, b, block_b=256):
    """Returns (ensemble_predictions, model_predictions) like EnsembleOutput.

    x: (B, D), w: (E, D, C), b: (E, C)
    """
    E, D, C = w.shape
    B, _ = x.shape

    # --- wrapper-side layout plumbing (one-time, cheap XLA ops) -------------
    # Flatten the heads lane-major: column group [e*C:(e+1)*C] is member e.
    w_flat = jnp.transpose(w, (1, 0, 2)).reshape(D, E * C)          # (D, E*C)
    # Fold the bias into the matmul: extra ones-column on x, bias row on W.
    w_aug = jnp.concatenate([w_flat, b.reshape(1, E * C)], axis=0)  # (D+1, E*C)
    x_aug = jnp.concatenate([x, jnp.ones((B, 1), dtype=x.dtype)], axis=1)  # (B, D+1)
    D1 = D + 1

    # Batch tiling: bounds VMEM and gives a parallel axis for v7x megacore.
    tb = min(B, block_b)
    grid = (pl.cdiv(B, tb),)

    kernel = functools.partial(_ensemble_lse_kernel, num_members=E, num_classes=C)

    ye_flat, pred = pl.pallas_call(
        kernel,
        out_shape=(
            jax.ShapeDtypeStruct((B, E * C), x.dtype),  # model_predictions (flat)
            jax.ShapeDtypeStruct((B, C), x.dtype),      # ensemble_predictions
        ),
        grid_spec=pltpu.PrefetchScalarGridSpec(
            num_scalar_prefetch=0,
            grid=grid,
            in_specs=[
                pl.BlockSpec((tb, D1), lambda i: (i, 0)),       # x tile
                pl.BlockSpec((D1, E * C), lambda i: (0, 0)),    # all weights, resident
            ],
            out_specs=[
                pl.BlockSpec((tb, E * C), lambda i: (i, 0)),    # lane-dense y_e store
                pl.BlockSpec((tb, C), lambda i: (i, 0)),        # logsumexp output
            ],
        ),
        compiler_params=pltpu.CompilerParams(
            dimension_semantics=("parallel",),  # batch tiles are independent
        ),
    )(x_aug, w_aug)

    # Back to the module's (E, B, C) layout for model_predictions.
    ye = jnp.transpose(ye_flat.reshape(B, E, C), (1, 0, 2))
    # EnsembleOutput(ensemble_predictions=pred, model_predictions=ye)
    return pred, ye


if __name__ == "__main__":
    E, B, D, C = 4, 8, 32, 16

    key = jax.random.PRNGKey(0)
    kx, kw, kb = jax.random.split(key, 3)
    x = jax.random.normal(kx, (B, D), dtype=jnp.float32)
    w = jax.random.normal(kw, (E, D, C), dtype=jnp.float32) * 0.1
    b = jax.random.normal(kb, (E, C), dtype=jnp.float32) * 0.1

    pred, ye = sklearn_logsumexp_ensemble(x, w, b)
    jax.block_until_ready((pred, ye))

    # Reference check (pure JAX), mirrors torch.logsumexp(y_e_, dim=0).
    ye_ref = jnp.einsum("bd,edc->ebc", x, w) + b[:, None, :]
    pred_ref = jax.nn.logsumexp(ye_ref, axis=0)
    assert jnp.allclose(ye, ye_ref, atol=1e-5, rtol=1e-5)
    assert jnp.allclose(pred, pred_ref, atol=1e-5, rtol=1e-5)

    print("KERNEL_OK")
</pallas_src>

<mosaic_0001>
module attributes {stable_mosaic.version = 11 : i64} {
  func.func @_ensemble_lse_kernel(%arg0: i32, %arg1: memref<8x33xf32, #tpu.memory_space<vmem>>, %arg2: memref<33x64xf32, #tpu.memory_space<vmem>>, %arg3: memref<8x64xf32, #tpu.memory_space<vmem>>, %arg4: memref<8x16xf32, #tpu.memory_space<vmem>>) attributes {dimension_semantics = [#tpu.dimension_semantics<parallel>], iteration_bounds = array<i64: 1>, scalar_prefetch = 0 : i64, scratch_operands = 0 : i64, tpu.core_type = #tpu.core_type<tc>, window_params = [{transform_indices = @transform_0, window_bounds = array<i64: 8, 33>}, {pipeline_mode = #tpu.pipeline_mode<synchronous>, transform_indices = @transform_1, window_bounds = array<i64: 33, 64>}, {transform_indices = @transform_2, window_bounds = array<i64: 8, 64>}, {transform_indices = @transform_3, window_bounds = array<i64: 8, 16>}]} {
    %c0 = arith.constant 0 : index
    %c0_0 = arith.constant 0 : index
    %0 = vector.load %arg1[%c0, %c0_0] : memref<8x33xf32, #tpu.memory_space<vmem>>, vector<8x33xf32>
    %c0_1 = arith.constant 0 : index
    %c0_2 = arith.constant 0 : index
    %1 = vector.load %arg2[%c0_1, %c0_2] : memref<33x64xf32, #tpu.memory_space<vmem>>, vector<33x64xf32>
    %cst = arith.constant dense<0.000000e+00> : vector<8x64xf32>
    %2 = tpu.matmul %0, %1, %cst {dimension_numbers = #tpu.dot_dimension_numbers<[1], [0], [0], [1], [0, 0, 1, 1], [], []>} : vector<8x33xf32>, vector<33x64xf32>, vector<8x64xf32> -> vector<8x64xf32>
    %c0_3 = arith.constant 0 : index
    %c0_4 = arith.constant 0 : index
    %3 = vector.load %arg3[%c0_3, %c0_4] : memref<8x64xf32, #tpu.memory_space<vmem>>, vector<8x64xf32>
    tpu.vector_store %arg3[%c0_3, %c0_4], %2 {strides = array<i32>} : memref<8x64xf32, #tpu.memory_space<vmem>>, vector<8x64xf32>,
    %4 = vector.extract_strided_slice %2 {offsets = [0, 0], sizes = [8, 16], strides = [1, 1]} : vector<8x64xf32> to vector<8x16xf32>
    %5 = vector.extract_strided_slice %2 {offsets = [0, 16], sizes = [8, 16], strides = [1, 1]} : vector<8x64xf32> to vector<8x16xf32>
    %6 = arith.maximumf %4, %5 : vector<8x16xf32>
    %7 = vector.extract_strided_slice %2 {offsets = [0, 32], sizes = [8, 16], strides = [1, 1]} : vector<8x64xf32> to vector<8x16xf32>
    %8 = arith.maximumf %6, %7 : vector<8x16xf32>
    %9 = vector.extract_strided_slice %2 {offsets = [0, 48], sizes = [8, 16], strides = [1, 1]} : vector<8x64xf32> to vector<8x16xf32>
    %10 = arith.maximumf %8, %9 : vector<8x16xf32>
    %11 = vector.extract_strided_slice %2 {offsets = [0, 0], sizes = [8, 16], strides = [1, 1]} : vector<8x64xf32> to vector<8x16xf32>
    %12 = arith.subf %11, %10 : vector<8x16xf32>
    %13 = math.exp %12 : vector<8x16xf32>
    %14 = vector.extract_strided_slice %2 {offsets = [0, 16], sizes = [8, 16], strides = [1, 1]} : vector<8x64xf32> to vector<8x16xf32>
    %15 = arith.subf %14, %10 : vector<8x16xf32>
    %16 = math.exp %15 : vector<8x16xf32>
    %17 = arith.addf %13, %16 : vector<8x16xf32>
    %18 = vector.extract_strided_slice %2 {offsets = [0, 32], sizes = [8, 16], strides = [1, 1]} : vector<8x64xf32> to vector<8x16xf32>
    %19 = arith.subf %18, %10 : vector<8x16xf32>
    %20 = math.exp %19 : vector<8x16xf32>
    %21 = arith.addf %17, %20 : vector<8x16xf32>
    %22 = vector.extract_strided_slice %2 {offsets = [0, 48], sizes = [8, 16], strides = [1, 1]} : vector<8x64xf32> to vector<8x16xf32>
    %23 = arith.subf %22, %10 : vector<8x16xf32>
    %24 = math.exp %23 : vector<8x16xf32>
    %25 = arith.addf %21, %24 : vector<8x16xf32>
    %26 = math.log %25 : vector<8x16xf32>
    %27 = arith.addf %10, %26 : vector<8x16xf32>
    %c0_5 = arith.constant 0 : index
    %c0_6 = arith.constant 0 : index
    %28 = vector.load %arg4[%c0_5, %c0_6] : memref<8x16xf32, #tpu.memory_space<vmem>>, vector<8x16xf32>
    tpu.vector_store %arg4[%c0_5, %c0_6], %27 {strides = array<i32>} : memref<8x16xf32, #tpu.memory_space<vmem>>, vector<8x16xf32>,
    return
  }
  func.func @transform_0(%arg0: i32) -> (i32, i32) {
    %c0_i32 = arith.constant 0 : i32
    %c0_i32_0 = arith.constant 0 : i32
    return %arg0, %c0_i32 : i32, i32
  }
  func.func @transform_1(%arg0: i32) -> (i32, i32) {
    %c0_i32 = arith.constant 0 : i32
    %c0_i32_0 = arith.constant 0 : i32
    %c0_i32_1 = arith.constant 0 : i32
    return %c0_i32, %c0_i32_0 : i32, i32
  }
  func.func @transform_2(%arg0: i32) -> (i32, i32) {
    %c0_i32 = arith.constant 0 : i32
    %c0_i32_0 = arith.constant 0 : i32
    return %arg0, %c0_i32 : i32, i32
  }
  func.func @transform_3(%arg0: i32) -> (i32, i32) {
    %c0_i32 = arith.constant 0 : i32
    %c0_i32_0 = arith.constant 0 : i32
    return %arg0, %c0_i32 : i32, i32
  }
}

</mosaic_0001>

<llo_original>
// kernel: sklearn_logsumexp_ensemble.1
$region0: #{sklearn_logsumexp_ensemble.1}
  #allocation0 [shape = 'u32[]', space=smem, size = 0x4, offset = 0x4, fixed_abs, tag = 'smem constant byte address 0x4 - core index']
  #allocation1 [shape = 'u32[144,128]{1,0:T(1,128)}', space=vmem, size = 0x12000, scoped, tag = 'internal scratch']
  %s0 = inlined_call_operand.vmem [shape: f32[8,33], index: 0, kind: input, shape index: {}]
  %s1 = inlined_call_operand.vmem [shape: f32[33,64], index: 1, kind: input, shape index: {}]
  %s2 = inlined_call_operand.vmem [shape: f32[8,64], index: 2, kind: output, shape index: {0}]
  %s3 = inlined_call_operand.hbm [shape: f32[8,16], index: 3, kind: output, shape index: {1}]
  %4 = xla_tuple %s2, %s3
  %s5 = sld [smem:[#allocation0]]
  $region26: #{sklearn_logsumexp_ensemble.1} parent=0
    _
  %s7 = ssub.s32 1, %s5
  %s8 = scalar_select 0, %s7, %s5
  $region1: #{sklearn_logsumexp_ensemble.1} parent=0
    #allocation2 [shape = 'u8[4096]{0}', space=vmem, size = 0x1000, scoped, tag = 'output window, operand 1, single buffered']
    #allocation3 [shape = 's32[1]{0}', space=sflag, size = 0x4, scoped, tag = 'scoped memory for sklearn_logsumexp_ensemble.1']
    %9 = vsyncpa [#allocation3], 0
    // Predicated region
    $region2: #{sklearn_logsumexp_ensemble.1} parent=1 // pred_check
      _
    $region3: #{sklearn_logsumexp_ensemble.1} parent=1 // pred_check_branch
      %11 = sbr.rel (0) target = $region5
    $region4: #{sklearn_logsumexp_ensemble.1} parent=1 // pred_region
      _
    $region5: #{sklearn_logsumexp_ensemble.1} parent=1 // pred_fallthru
      _
    // Predicated region
    $region6: #{sklearn_logsumexp_ensemble.1} parent=1 // pred_check
      _
    $region7: #{sklearn_logsumexp_ensemble.1} parent=1 // pred_check_branch
      %13 = sbr.rel (0) target = $region9
    $region8: #{sklearn_logsumexp_ensemble.1} parent=1 // pred_region
      _
    $region9: #{sklearn_logsumexp_ensemble.1} parent=1 // pred_fallthru
      _
    %v14 = vld [vmem:[%s0] sm:$0xff]
    %v15 = vld [vmem:[%s1] sm:$0xff]
    %v16 = vld [vmem:[%s1 + $0x8] sm:$0xff]
    %v17 = vld [vmem:[%s1 + $0x10] sm:$0xff]
    %v18 = vld [vmem:[%s1 + $0x18] sm:$0xff]
    %v19 = vld [vmem:[%s1 + $0x20] sm:$0x1]
    %vm20 = vcmask 269312
    %v22 = vsel %vm20, %v14, 0
    %vm24 = vcmask 1040384
    %v26 = vsel %vm24, %v19, 0
    %28 = vmatprep.subr.mxu0 0.0
    %29 = vmatpush1.msra.mxu0 %v15
    %30 = vmatprep.subr.mxu0 0.0
    %31 = vmatpush1.msra.mxu0 %v16
    %32 = vmatprep.subr.mxu0 0.0
    %33 = vmatpush1.msra.mxu0 %v17
    %34 = vmatprep.subr.mxu0 0.0
    %35 = vmatpush1.msra.mxu0 %v18
    %36 = vmatprep.subr.mxu0 0.0
    %37 = vmatpush1.msra.mxu0 %v26
    %38 = vmatprep.subr.mxu0 0.0
    %39 = vmatpush1.msra.mxu0 0.0
    %40 = vmatprep.subr.mxu0 0.0
    %41 = vmatpush1.msra.mxu0 0.0
    %42 = vmatprep.subr.mxu0 0.0
    %43 = vmatpush1.msra.mxu0 0.0
    %44 = vmatprep.subr.mxu0 0.0
    %45 = vmatpush1.msra.mxu0 0.0
    %46 = vmatprep.subr.mxu0 0.0
    %47 = vmatpush1.msra.mxu0 0.0
    %48 = vmatprep.subr.mxu0 0.0
    %49 = vmatpush1.msra.mxu0 0.0
    %50 = vmatprep.subr.mxu0 0.0
    %51 = vmatpush1.msra.mxu0 0.0
    %52 = vmatprep.subr.mxu0 0.0
    %53 = vmatpush1.msra.mxu0 0.0
    %54 = vmatprep.subr.mxu0 0.0
    %55 = vmatpush1.msra.mxu0 0.0
    %56 = vmatprep.subr.mxu0 0.0
    %57 = vmatpush1.msra.mxu0 0.0
    %58 = vmatprep.subr.mxu0 0.0
    %59 = vmatpush1.msra.mxu0 0.0
    %60 = vmatprep.subr.mxu0 0.0
    %61 = vmatpush1.msra.mxu0 0.0
    %62 = vmatprep.subr.mxu0 0.0
    %63 = vmatpush1.msra.mxu0 0.0
    %64 = vmatprep.subr.mxu0 0.0
    %65 = vmatpush1.msra.mxu0 0.0
    %66 = vmatprep.subr.mxu0 0.0
    %67 = vmatpush1.msra.mxu0 0.0
    %68 = vmatprep.subr.mxu0 0.0
    %69 = vmatpush1.msra.mxu0 0.0
    %70 = vmatprep.subr.mxu0 0.0
    %71 = vmatpush1.msra.mxu0 0.0
    %72 = vmatprep.subr.mxu0 0.0
    %73 = vmatpush1.msra.mxu0 0.0
    %74 = vmatprep.subr.mxu0 0.0
    %75 = vmatpush1.msra.mxu0 0.0
    %76 = vmatprep.subr.mxu0 0.0
    %77 = vmatpush1.msra.mxu0 0.0
    %78 = vmatprep.subr.mxu0 0.0
    %79 = vmatpush1.msra.mxu0 0.0
    %80 = vmatprep.subr.mxu0 0.0
    %81 = vmatpush1.msra.mxu0 0.0
    %82 = vmatprep.subr.mxu0 0.0
    %83 = vmatpush1.msra.mxu0 0.0
    %84 = vmatprep.subr.mxu0 0.0
    %85 = vmatpush1.msra.mxu0 0.0
    %86 = vmatprep.subr.mxu0 0.0
    %87 = vmatpush1.msra.mxu0 0.0
    %88 = vmatprep.subr.mxu0 0.0
    %89 = vmatpush1.msra.mxu0 0.0
    %90 = vmatprep.subr.mxu0 0.0
    %91 = vmatpush1.msra.mxu0 0.0
    %92 = vmatprep.mubr.f32.mxu0 0.0
    %93 = vmatmul.mubr.f32.gmra.mrb[0].mxu0 %v22
    %v94 = vpop.f32.mrb[0].mxu0
    %v95 = vadd.f32 0.0, %v94
    %v96 = vpop.f32.mrb[0].mxu0
    %97 = vdwg.mxu0
    %vm98 = vcmask 523264
    %99 = vst.msk [vmem:[%s2] sm:$0xff] %vm98, %v95
    %101 = vrot.lane.b32.xlu0 %v95, 112
    %v102 = vpop.permute.xlu0 %101
    %v104 = vmax.f32 %v95, %v102
    %105 = vrot.lane.b32.xlu0 %v95, 96
    %v106 = vpop.permute.xlu0 %105
    %v108 = vmax.f32 %v104, %v106
    %109 = vrot.lane.b32.xlu0 %v95, 80
    %v110 = vpop.permute.xlu0 %109
    %v112 = vmax.f32 %v108, %v110
    %v113 = vsub.f32 %v95, %v112
    %v114 = vmul.f32 %v113, 1.442695
    %v115 = vpow.pop %v114
    %117 = vrot.lane.b32.xlu0 %v112, 16
    %v118 = vpop.permute.xlu0 %117
    %v120 = vsub.f32 %v95, %v118
    %v121 = vmul.f32 %v120, 1.442695
    %v122 = vpow.pop %v121
    %124 = vrot.lane.b32.xlu0 %v122, 112
    %v125 = vpop.permute.xlu0 %124
    %v127 = vadd.f32 %v115, %v125
    %128 = vrot.lane.b32.xlu0 %v112, 32
    %v129 = vpop.permute.xlu0 %128
    %v131 = vsub.f32 %v95, %v129
    %v132 = vmul.f32 %v131, 1.442695
    %v133 = vpow.pop %v132
    %135 = vrot.lane.b32.xlu0 %v133, 96
    %v136 = vpop.permute.xlu0 %135
    %v138 = vadd.f32 %v127, %v136
    %139 = vrot.lane.b32.xlu0 %v112, 48
    %v140 = vpop.permute.xlu0 %139
    %v142 = vsub.f32 %v95, %v140
    %v143 = vmul.f32 %v142, 1.442695
    %v144 = vpow.pop %v143
    %146 = vrot.lane.b32.xlu0 %v144, 80
    %v147 = vpop.permute.xlu0 %146
    %v149 = vadd.f32 %v138, %v147
    %v150 = vlog2.pop %v149
    %v151 = vmul.f32 %v150, 0.6931472
    %v152 = vadd.f32 %v112, %v151
    %vm153 = vcmask 130048
    %154 = vst.msk [vmem:[#allocation2] sm:$0xff] %vm153, %v152
    // Predicated region
    $region10: #{sklearn_logsumexp_ensemble.1} parent=1 // pred_check
      _
    $region11: #{sklearn_logsumexp_ensemble.1} parent=1 // pred_check_branch
      %156 = sbr.rel (0) target = $region13
    $region12: #{sklearn_logsumexp_ensemble.1} parent=1 // pred_region
      _
    $region13: #{sklearn_logsumexp_ensemble.1} parent=1 // pred_fallthru
      _
    // Predicated region
    $region14: #{sklearn_logsumexp_ensemble.1} parent=1 // pred_check
      _
    $region15: #{sklearn_logsumexp_ensemble.1} parent=1 // pred_check_branch
      %158 = sbr.rel (0) target = $region17
    $region16: #{sklearn_logsumexp_ensemble.1} parent=1 // pred_region
      %s160 = ssub.s32 128, 128
      %161 = vsyncadd [#allocation3], %s160
      %s163 = sshll.u32 [#allocation2], 4
      %s164 = int_to_ptr.vmem [resolvable:$true] %s163
      %166 = dma.vmem_to_hbm [thread:$0]  %s164, 128, %s3, [#allocation3]
    $region17: #{sklearn_logsumexp_ensemble.1} parent=1 // pred_fallthru
      _
    // Predicated region
    $region18: #{sklearn_logsumexp_ensemble.1} parent=1 // pred_check
      _
    $region19: #{sklearn_logsumexp_ensemble.1} parent=1 // pred_check_branch
      %168 = sbr.rel (0) target = $region21
    $region20: #{sklearn_logsumexp_ensemble.1} parent=1 // pred_region
      _
    $region21: #{sklearn_logsumexp_ensemble.1} parent=1 // pred_fallthru
      _
    // Predicated region
    $region22: #{sklearn_logsumexp_ensemble.1} parent=1 // pred_check
      _
    $region23: #{sklearn_logsumexp_ensemble.1} parent=1 // pred_check_branch
      %170 = sbr.rel (0) target = $region25
    $region24: #{sklearn_logsumexp_ensemble.1} parent=1 // pred_region
      %171 = dma.done [#allocation3], 128
    $region25: #{sklearn_logsumexp_ensemble.1} parent=1 // pred_fallthru
      _
    %172 = vsyncpa [#allocation3], 1

</llo_original>
